<compile_context>
chip_gen: v7x
topology: tpu7x:2x2x1
jax: 0.10.0
libtpu: 0.0.40
codegen_flags: <defaults>
</compile_context>

<pallas_src>
import numpy as np
import jax
import jax.numpy as jnp
from jax.experimental import pallas as pl
from jax.experimental.pallas import tpu as pltpu


_LANES = 128                    # vreg lane width (last dim)
_TARGET_BLOCK_BYTES = 2 << 20   # ~2 MiB per buffer per grid step (4096 f32 rows)
_VMEM_LIMIT_BYTES = 32 << 20    # covers in+out double-buffered with headroom;
                                # <= v7x physical 64 MiB, raises v5e's 16 MiB default


def _block_geometry(dtype):
    """dtype-aware sublane packing and ~2 MiB block rows (multiple of sublanes)."""
    itemsize = int(jnp.dtype(dtype).itemsize)
    sublanes = max(8, 32 // max(itemsize, 1))       # 8 f32 / 16 bf16 / 32 int8,fp8
    block_rows = _TARGET_BLOCK_BYTES // (_LANES * itemsize)
    block_rows = max(sublanes, (block_rows // sublanes) * sublanes)
    return block_rows, sublanes


# ----------------------------- Pallas kernels -------------------------------

def _mask_kernel(thresh_ref, loss_ref, out_ref):
    # thresh_ref: (1, 1) f32 in SMEM (cutoff; +inf during warm-up)
    # loss_ref  : (block_rows, 128) tile in VMEM
    # out_ref   : (block_rows, 128) tile in VMEM, same dtype as loss
    t = thresh_ref[0, 0]
    out_ref[...] = (loss_ref[...] < t).astype(out_ref.dtype)


def _masked_loss_kernel(thresh_ref, loss_ref, out_ref):
    # Fused variant: masked loss = loss * (loss < t), one read + one write.
    t = thresh_ref[0, 0]
    x = loss_ref[...]
    out_ref[...] = jnp.where(x < t, x, jnp.zeros_like(x))


def _launch_elementwise(kernel_fn, loss, thresh_2d):
    """Run an elementwise (thresh, loss) -> out kernel over a lane-dense layout."""
    orig_shape = loss.shape
    n = int(loss.size)
    if n == 0:
        return loss
    dtype = loss.dtype
    itemsize = int(jnp.dtype(dtype).itemsize)
    block_rows, _ = _block_geometry(dtype)

    flat = loss.reshape(-1)
    rows = -(-n // _LANES)
    padded = (rows * _LANES) != n
    if padded:
        # Ragged tail only: pad to the next multiple of 128 lanes.
        # TODO(synk): mask the ragged tail inside the kernel instead to avoid
        # the pad/slice copies entirely.
        flat = jnp.pad(flat, (0, rows * _LANES - n))
    x2d = flat.reshape(rows, _LANES)

    if rows <= block_rows:
        br = rows           # single block equal to the full array dims
    else:
        br = block_rows     # multiple of this dtype's sublane count
    grid = (pl.cdiv(rows, br),)   # trailing partial block is masked by Pallas

    nbytes = rows * _LANES * itemsize
    out2d = pl.pallas_call(
        kernel_fn,
        out_shape=jax.ShapeDtypeStruct((rows, _LANES), dtype),
        grid=grid,
        in_specs=[
            pl.BlockSpec(memory_space=pltpu.SMEM),            # cutoff scalar
            pl.BlockSpec((br, _LANES), lambda i: (i, 0)),     # loss tile
        ],
        out_specs=pl.BlockSpec((br, _LANES), lambda i: (i, 0)),
        compiler_params=pltpu.CompilerParams(
            dimension_semantics=("parallel",),    # lets v7x's 2 TCs split the grid
            vmem_limit_bytes=_VMEM_LIMIT_BYTES),
        cost_estimate=pl.CostEstimate(
            flops=rows * _LANES, transcendentals=0, bytes_accessed=2 * nbytes),
    )(thresh_2d, x2d)

    if padded:
        return out2d.reshape(-1)[:n].reshape(orig_shape)
    return out2d.reshape(orig_shape)          # free reshape: no pad, no slice


@jax.jit
def _pallas_mask_jit(loss, thresh_2d):
    """mask = (loss < thresh).astype(loss.dtype)"""
    return _launch_elementwise(_mask_kernel, loss, thresh_2d)


@jax.jit
def _pallas_masked_loss_jit(loss, thresh_2d):
    """fused: loss * (loss < thresh) in a single streaming pass."""
    return _launch_elementwise(_masked_loss_kernel, loss, thresh_2d)


# --------------------------- Stateful wrapper -------------------------------

class MovingLossDropper:
    """JAX/Pallas port of the PyTorch MovingLossDropper.

    forward(loss)        -> 0/1 mask in loss.dtype   (matches the original)
    forward_masked(loss) -> loss * mask, fused       (use instead of forward()
                            + a separate multiply; updates the same state)
    """

    def __init__(self, dropc=0.1, min_count=10000, recompute=10000, verbose=True):
        self.keepc = 1.0 - dropc
        self.count = 0
        self.min_count = min_count
        self.recompute = recompute
        self.last_computed = 0
        self.cur_idx = 0
        self.percentile_val = None
        self.verbose = verbose
        self.vals = np.zeros(self.recompute, dtype=np.float32)
        # cached device-resident cutoff scalar (rebuilt only when it changes)
        self._thresh_host = None
        self._thresh_dev = None

    def _threshold_device(self, value):
        v = float(value)
        if self._thresh_host != v or self._thresh_dev is None:
            self._thresh_dev = jnp.full((1, 1), v, dtype=jnp.float32)
            self._thresh_host = v
        return self._thresh_dev

    def _cutoff(self):
        # Guard: original would crash if percentile_val is still None here
        # (min_count < recompute); fall back to +inf (keep everything).
        return self.percentile_val if self.percentile_val is not None else np.inf

    def __call__(self, loss):
        return self.forward(loss)

    def forward(self, loss):
        return self._step(loss, _pallas_mask_jit)

    def forward_masked(self, loss):
        return self._step(loss, _pallas_masked_loss_jit)

    def _step(self, loss, jit_fn):
        if loss is None:
            return loss
        numel = int(loss.size)
        L = len(self.vals)

        self.last_computed += numel
        self.count += numel

        warm_up = self.count < L
        min_gate = (not warm_up) and (self.count < self.min_count)
        will_recompute = ((not warm_up) and (not min_gate)
                          and (self.last_computed > self.recompute))

        # Start the D2H copy early (non-blocking) so it overlaps with the
        # device kernel launch below and the host bookkeeping.
        if hasattr(loss, "copy_to_host_async"):
            loss.copy_to_host_async()

        # If this step's cutoff cannot change (warm-up / min_count gate / no
        # recompute this step), launch the async Pallas kernel *before* the
        # blocking host work so device compute overlaps host bookkeeping.
        result = None
        if warm_up or min_gate:
            result = jit_fn(loss, self._threshold_device(np.inf))
        elif not will_recompute:
            result = jit_fn(loss, self._threshold_device(self._cutoff()))

        # TODO(synk): move the ring buffer + percentile (top-k) + EMA onto
        # device to remove the per-step host sync entirely; kept on host so
        # the percentile sees exactly the same values as the original module.
        loss_np = np.asarray(jax.device_get(loss), dtype=np.float32).reshape(-1)

        if warm_up:
            # warm-up: fill ring buffer, cutoff = +inf
            self.vals[self.count - numel:self.count] = loss_np
            self.cur_idx += numel
            return result

        # Vectorized ring-buffer update with wrap-around (== the original
        # per-element loop).
        # TODO(synk): the original iterates only the first axis of a >1-D loss
        # when filling the ring buffer (a latent bug); we use flattened elements.
        start = self.cur_idx % L
        if numel >= L:
            tail = loss_np[-L:]
            first = (start + (numel - L)) % L
            idx = (first + np.arange(L)) % L
            self.vals[idx] = tail
        else:
            idx = (start + np.arange(numel)) % L
            self.vals[idx] = loss_np
        self.cur_idx = (start + numel) % L

        if min_gate:
            return result

        if will_recompute:
            new_percentile = np.percentile(self.vals, self.keepc * 100)
            if self.percentile_val is None:
                self.percentile_val = new_percentile
            else:
                self.percentile_val = 0.5 * self.percentile_val + 0.5 * new_percentile
            if self.verbose:
                print('Using cutoff', self.percentile_val)
                print(loss)   # NOTE: forces a sync, same as the original module
            self.last_computed = 0
            result = jit_fn(loss, self._threshold_device(self._cutoff()))

        return result


# --------------------------------- Demo -------------------------------------

if __name__ == "__main__":
    key = jax.random.PRNGKey(0)
    k1, k2, k3, k4, k5, k6 = jax.random.split(key, 6)

    # Case A: warm-up path (large min_count) -> mask == (loss < inf) == ones.
    loss_a = jax.random.uniform(k1, (2, 256), dtype=jnp.float32) * 5.0
    dropper_a = MovingLossDropper(dropc=0.1, min_count=10**6, recompute=4096,
                                  verbose=False)
    mask_a = jax.block_until_ready(dropper_a(loss_a))
    assert mask_a.shape == loss_a.shape and mask_a.dtype == loss_a.dtype
    np.testing.assert_allclose(np.asarray(mask_a),
                               np.ones_like(np.asarray(loss_a)))

    # Case B: percentile + EMA path (small min_count / recompute).
    dropper_b = MovingLossDropper(dropc=0.1, min_count=256, recompute=256,
                                  verbose=False)
    loss_b1 = jax.random.uniform(k2, (1024,), dtype=jnp.float32) * 5.0
    loss_b2 = jax.random.uniform(k3, (1024,), dtype=jnp.float32) * 5.0
    mask_b1 = jax.block_until_ready(dropper_b(loss_b1))
    p1 = dropper_b.percentile_val
    mask_b2 = jax.block_until_ready(dropper_b(loss_b2))
    p2 = dropper_b.percentile_val
    ref_b1 = (np.asarray(loss_b1) < np.float32(p1)).astype(np.float32)
    ref_b2 = (np.asarray(loss_b2) < np.float32(p2)).astype(np.float32)
    np.testing.assert_allclose(np.asarray(mask_b1), ref_b1)
    np.testing.assert_allclose(np.asarray(mask_b2), ref_b2)
    assert set(np.unique(np.asarray(mask_b1))) <= {0.0, 1.0}
    assert set(np.unique(np.asarray(mask_b2))) <= {0.0, 1.0}

    # Case C: non-multiple-of-128 element count exercises the pad/slice path.
    loss_c = jax.random.uniform(jax.random.fold_in(key, 7), (3, 100),
                                dtype=jnp.float32)
    dropper_c = MovingLossDropper(dropc=0.1, min_count=10**6, recompute=4096,
                                  verbose=False)
    mask_c = jax.block_until_ready(dropper_c(loss_c))
    assert mask_c.shape == loss_c.shape
    np.testing.assert_allclose(np.asarray(mask_c),
                               np.ones_like(np.asarray(loss_c)))

    # Case D: fused masked-loss variant (recompute step, then no-recompute
    # step which exercises the early-launch path).
    dropper_d = MovingLossDropper(dropc=0.1, min_count=128, recompute=256,
                                  verbose=False)
    loss_d1 = jax.random.uniform(k4, (512,), dtype=jnp.float32) * 5.0
    loss_d2 = jax.random.uniform(k5, (128,), dtype=jnp.float32) * 5.0
    out_d1 = jax.block_until_ready(dropper_d.forward_masked(loss_d1))
    pd1 = dropper_d.percentile_val
    out_d2 = jax.block_until_ready(dropper_d.forward_masked(loss_d2))
    pd2 = dropper_d.percentile_val
    assert pd2 == pd1                       # second step did not recompute
    ld1, ld2 = np.asarray(loss_d1), np.asarray(loss_d2)
    ref_d1 = np.where(ld1 < np.float32(pd1), ld1, 0.0).astype(np.float32)
    ref_d2 = np.where(ld2 < np.float32(pd2), ld2, 0.0).astype(np.float32)
    np.testing.assert_allclose(np.asarray(out_d1), ref_d1)
    np.testing.assert_allclose(np.asarray(out_d2), ref_d2)

    # Case E: multi-block grid with a partial trailing block
    # (5000 rows > 4096-row block) on the percentile path.
    dropper_e = MovingLossDropper(dropc=0.1, min_count=4096, recompute=4096,
                                  verbose=False)
    loss_e = jax.random.uniform(k6, (5000, 128), dtype=jnp.float32) * 5.0
    mask_e = jax.block_until_ready(dropper_e(loss_e))
    pe = dropper_e.percentile_val
    ref_e = (np.asarray(loss_e) < np.float32(pe)).astype(np.float32)
    np.testing.assert_allclose(np.asarray(mask_e), ref_e)

    print("KERNEL_OK")
</pallas_src>

<mosaic_0001>
module attributes {stable_mosaic.version = 11 : i64} {
  func.func @_mask_kernel(%arg0: i32, %arg1: memref<1x1xf32, #tpu.memory_space<smem>>, %arg2: memref<4x128xf32, #tpu.memory_space<vmem>>, %arg3: memref<4x128xf32, #tpu.memory_space<vmem>>) attributes {dimension_semantics = [#tpu.dimension_semantics<parallel>], iteration_bounds = array<i64: 1>, scalar_prefetch = 0 : i64, scratch_operands = 0 : i64, tpu.core_type = #tpu.core_type<tc>, window_params = [{transform_indices = @transform_0, window_bounds = array<i64: 1, 1>}, {transform_indices = @transform_1, window_bounds = array<i64: 4, 128>}, {transform_indices = @transform_2, window_bounds = array<i64: 4, 128>}]} {
    %c0 = arith.constant 0 : index
    %c0_0 = arith.constant 0 : index
    %0 = memref.load %arg1[%c0, %c0_0] : memref<1x1xf32, #tpu.memory_space<smem>>
    %c0_1 = arith.constant 0 : index
    %c0_2 = arith.constant 0 : index
    %1 = vector.load %arg2[%c0_1, %c0_2] : memref<4x128xf32, #tpu.memory_space<vmem>>, vector<4x128xf32>
    %2 = vector.broadcast %0 : f32 to vector<4x128xf32>
    %3 = arith.cmpf olt, %1, %2 : vector<4x128xf32>
    %4 = arith.extui %3 : vector<4x128xi1> to vector<4x128xi32>
    %5 = arith.sitofp %4 : vector<4x128xi32> to vector<4x128xf32>
    %c0_3 = arith.constant 0 : index
    %c0_4 = arith.constant 0 : index
    %6 = vector.load %arg3[%c0_3, %c0_4] : memref<4x128xf32, #tpu.memory_space<vmem>>, vector<4x128xf32>
    tpu.vector_store %arg3[%c0_3, %c0_4], %5 {strides = array<i32>} : memref<4x128xf32, #tpu.memory_space<vmem>>, vector<4x128xf32>,
    return
  }
  func.func @transform_0(%arg0: i32) -> (i32, i32) {
    %c0_i32 = arith.constant 0 : i32
    %c0_i32_0 = arith.constant 0 : i32
    %c0_i32_1 = arith.constant 0 : i32
    return %c0_i32, %c0_i32_0 : i32, i32
  }
  func.func @transform_1(%arg0: i32) -> (i32, i32) {
    %c0_i32 = arith.constant 0 : i32
    %c0_i32_0 = arith.constant 0 : i32
    return %arg0, %c0_i32 : i32, i32
  }
  func.func @transform_2(%arg0: i32) -> (i32, i32) {
    %c0_i32 = arith.constant 0 : i32
    %c0_i32_0 = arith.constant 0 : i32
    return %arg0, %c0_i32 : i32, i32
  }
}

</mosaic_0001>

<llo_original>
// kernel: _pallas_mask_jit.1
$region0: #{_pallas_mask_jit.1}
  #allocation0 [shape = 'u32[]', space=smem, size = 0x4, offset = 0x4, fixed_abs, tag = 'smem constant byte address 0x4 - core index']
  #allocation1 [shape = 'u32[144,128]{1,0:T(1,128)}', space=vmem, size = 0x12000, scoped, tag = 'internal scratch']
  #allocation2 [shape = 'f32[1,1]{1,0:T(1,128)S(6)}', space=smem, size = 0x200, scoped, tag = 'scoped memory for _pallas_mask_jit.1']
  %s0 = inlined_call_operand.<no memory space> [shape: f32[1,1], index: 0, kind: input, shape index: {}]
  %s1 = inlined_call_operand.vmem [shape: f32[4,128], index: 1, kind: input, shape index: {}]
  %s2 = inlined_call_operand.vmem [shape: f32[4,128], index: 2, kind: output, shape index: {}]
  %s3 = sld [smem:[#allocation0]]
  $region18: #{_pallas_mask_jit.1} parent=0
    _
  %s5 = ssub.s32 1, %s3
  %s6 = scalar_select 0, %s5, %s3
  %7 = sst [smem:[#allocation2]] %s0
  // Predicated region
  $region2: #{_pallas_mask_jit.1} parent=0 // pred_check
    _
  $region3: #{_pallas_mask_jit.1} parent=0 // pred_check_branch
    %9 = sbr.rel (0) target = $region5
  $region4: #{_pallas_mask_jit.1} parent=0 // pred_region
    _
  $region5: #{_pallas_mask_jit.1} parent=0 // pred_fallthru
    _
  // Predicated region
  $region6: #{_pallas_mask_jit.1} parent=0 // pred_check
    _
  $region7: #{_pallas_mask_jit.1} parent=0 // pred_check_branch
    %11 = sbr.rel (0) target = $region9
  $region8: #{_pallas_mask_jit.1} parent=0 // pred_region
    _
  $region9: #{_pallas_mask_jit.1} parent=0 // pred_fallthru
    _
  %s12 = sld [smem:[#allocation2]]
  %v13 = vld [vmem:[%s1] sm:$0xf]
  %v14 = vstv %s12
  %vm15 = vcmp.lt.f32.partialorder %v13, %v14
  %v16 = vsel %vm15, 1, 0
  %v17 = vcvt.s32.f32 %v16
  %18 = vst [vmem:[%s2] sm:$0xf] %v17
  // Predicated region
  $region10: #{_pallas_mask_jit.1} parent=0 // pred_check
    _
  $region11: #{_pallas_mask_jit.1} parent=0 // pred_check_branch
    %20 = sbr.rel (0) target = $region13
  $region12: #{_pallas_mask_jit.1} parent=0 // pred_region
    _
  $region13: #{_pallas_mask_jit.1} parent=0 // pred_fallthru
    _
  // Predicated region
  $region14: #{_pallas_mask_jit.1} parent=0 // pred_check
    _
  $region15: #{_pallas_mask_jit.1} parent=0 // pred_check_branch
    %22 = sbr.rel (0) target = $region17
  $region16: #{_pallas_mask_jit.1} parent=0 // pred_region
    _
  $region17: #{_pallas_mask_jit.1} parent=0 // pred_fallthru
    _

</llo_original>
